<compile_context>
chip_gen: v6e
topology: v6e:2x2x1
jax: 0.10.0
libtpu: 0.0.40
codegen_flags: <defaults>
</compile_context>

<pallas_src>
import functools
import random

import numpy as np
import jax
import jax.numpy as jnp
from jax.experimental import pallas as pl
from jax.experimental.pallas import tpu as pltpu


# ----------------------------------------------------------------------------- #
# Bicubic weight-matrix construction (PyTorch semantics: align_corners=True,
# cubic convolution kernel with A = -0.75, replicate-border clamp).
# ----------------------------------------------------------------------------- #
def _cubic_weight(x, a=-0.75):
    ax = abs(float(x))
    if ax <= 1.0:
        return (a + 2.0) * ax**3 - (a + 3.0) * ax**2 + 1.0
    elif ax < 2.0:
        return a * ax**3 - 5.0 * a * ax**2 + 8.0 * a * ax - 4.0 * a
    return 0.0


def bicubic_weight_matrix(out_size, in_size):
    """Dense (out_size, in_size) W such that out = W @ in reproduces
    F.interpolate(mode='bicubic', align_corners=True) along one axis."""
    W = np.zeros((out_size, in_size), dtype=np.float32)
    for i in range(out_size):
        src = 0.0 if out_size == 1 else i * (in_size - 1) / (out_size - 1)
        f = np.floor(src)
        t = src - f
        for k in (-1, 0, 1, 2):
            idx = int(np.clip(f + k, 0, in_size - 1))  # replicate-border clamp
            W[i, idx] += _cubic_weight(t - k)
    return W


def folded_weight(out_size, crop_size, crop_start, paste_start, in_size):
    """Fold (zero-canvas paste at paste_start) + (length-`crop_size` crop at
    crop_start) + (bicubic resize crop_size->out_size, align_corners=True)
    into a single (out_size, in_size) matrix acting on the ORIGINAL axis."""
    Wc = bicubic_weight_matrix(out_size, crop_size)       # (out_size, crop_size)
    Wf = np.zeros((out_size, in_size), dtype=np.float32)
    for r in range(crop_size):
        p = crop_start + r - paste_start                  # position in original input
        if 0 <= p < in_size:                              # outside -> canvas zeros
            Wf[:, p] += Wc[:, r]
    return Wf


def _round_up(v, m):
    return ((v + m - 1) // m) * m


def _largest_divisor_leq(n, cap):
    cap = max(1, min(n, cap))
    for d in range(cap, 0, -1):
        if n % d == 0:
            return d
    return 1


def _pick_t_tile(t_pad, max_tile=512):
    """Largest multiple of 128 that divides t_pad and is <= max_tile."""
    if t_pad <= max_tile:
        return t_pad
    d = max_tile - (max_tile % 128)
    while d >= 128:
        if t_pad % d == 0:
            return d
        d -= 128
    return 128


# ----------------------------------------------------------------------------- #
# Pallas kernel: per-sample separable bicubic resize, fully on the MXU.
# Per sample b in the batch block, per T tile:
#   t      = x[b] (C*H_pad, W_pad) @ wtT[b] (W_pad, T_tile)      -> (C*H_pad, T_tile)
#   out[c] = wf[b] (F_pad, H_pad)  @ t[c*H_pad:(c+1)*H_pad, :]   -> (F_pad, T_tile)
# ----------------------------------------------------------------------------- #
def _make_kernel(bt, c, h_pad, compute_dtype):
    cd = compute_dtype

    def kernel(wf_ref, wtT_ref, x_ref, out_ref):
        # wf_ref : (bt, F_pad, H_pad)      compute dtype
        # wtT_ref: (bt, W_pad, T_tile)     compute dtype
        # x_ref  : (bt, c*H_pad, W_pad)    input dtype (f32) — cast in-kernel (VPU)
        # out_ref: (bt, c, F_pad, T_tile)  compute dtype
        for b in range(bt):
            xb = x_ref[b].astype(cd)                      # in-kernel cast, no XLA pass
            # time-axis resize: one MXU dot for all channels (C folded into rows)
            t = jnp.dot(xb, wtT_ref[b], preferred_element_type=cd)
            wf = wf_ref[b]
            # frequency-axis resize: shared wf applied per channel (no kron blow-up)
            for ci in range(c):
                t_c = t[ci * h_pad:(ci + 1) * h_pad, :]
                out_ref[b, ci] = jnp.dot(
                    wf, t_c, preferred_element_type=jnp.float32
                ).astype(out_ref.dtype)

    return kernel


@functools.lru_cache(maxsize=None)
def _build_resize_call(B, C, H_pad, W_pad, F_pad, T_pad, T_tile, Bt,
                       compute_dtype, batch_sem_name):
    """compute_dtype is a hashable np.dtype; batch_sem_name in
    {'core_parallel', 'parallel'}."""
    cd = np.dtype(compute_dtype)
    nb = B // Bt
    nt = T_pad // T_tile
    sem_map = {
        "core_parallel": pltpu.CORE_PARALLEL,   # v7x: shard batch blocks across 2 TCs
        "parallel": pltpu.PARALLEL,
        "arbitrary": pltpu.ARBITRARY,
    }
    batch_sem = sem_map[batch_sem_name]

    # Explicit VMEM budget (double-buffered blocks + intermediates, with headroom)
    # so double-buffering survives v7x's smaller 64 MiB VMEM.
    x_blk = Bt * C * H_pad * W_pad * 4
    wt_blk = Bt * W_pad * T_tile * cd.itemsize
    wf_blk = Bt * F_pad * H_pad * cd.itemsize
    out_blk = Bt * C * F_pad * T_tile * cd.itemsize
    t_bytes = C * H_pad * T_tile * 4
    est = 2 * (x_blk + wt_blk + wf_blk + out_blk) + 4 * t_bytes
    vmem_limit = int(min(48 * 2**20, max(2 * est, 4 * 2**20)))

    kernel = _make_kernel(Bt, C, H_pad, cd)

    call = pl.pallas_call(
        kernel,
        out_shape=jax.ShapeDtypeStruct((B, C, F_pad, T_pad), cd),
        grid=(nb, nt),
        in_specs=[
            pl.BlockSpec((Bt, F_pad, H_pad), lambda bb, tt: (bb, 0, 0)),
            pl.BlockSpec((Bt, W_pad, T_tile), lambda bb, tt: (bb, 0, tt)),
            pl.BlockSpec((Bt, C * H_pad, W_pad), lambda bb, tt: (bb, 0, 0)),
        ],
        out_specs=pl.BlockSpec((Bt, C, F_pad, T_tile),
                               lambda bb, tt: (bb, 0, 0, tt)),
        compiler_params=pltpu.CompilerParams(
            dimension_semantics=(batch_sem, pltpu.ARBITRARY),
            vmem_limit_bytes=vmem_limit,
        ),
    )
    return jax.jit(call)


# Module-level cache of which batch-axis dimension semantics actually lowers on
# this chip (CORE_PARALLEL on multi-TC parts, PARALLEL fallback elsewhere).
_RESOLVED_BATCH_SEM = None


# ----------------------------------------------------------------------------- #
# RandomResizeCrop: host-side random params + weight folding, single TPU launch.
# ----------------------------------------------------------------------------- #
class RandomResizeCrop:
    def __init__(self, virtual_crop_scale=(1.0, 1.5),
                 freq_scale=(0.6, 1.5), time_scale=(0.6, 1.5),
                 compute_dtype=jnp.bfloat16):
        self.virtual_crop_scale = virtual_crop_scale
        self.freq_scale = freq_scale
        self.time_scale = time_scale
        self.compute_dtype = compute_dtype
        assert time_scale[1] >= 1.0 and freq_scale[1] >= 1.0

    @staticmethod
    def get_params(virtual_crop_size, in_size, time_scale, freq_scale):
        canvas_h, canvas_w = virtual_crop_size
        src_h, src_w = in_size
        h = int(np.clip(int(np.random.uniform(*freq_scale) * src_h), 1, canvas_h))
        w = int(np.clip(int(np.random.uniform(*time_scale) * src_w), 1, canvas_w))
        i = random.randint(0, canvas_h - h) if canvas_h > h else 0
        j = random.randint(0, canvas_w - w) if canvas_w > w else 0
        return i, j, h, w

    def _canvas_geometry(self, H, W):
        canvas_h = int(H * self.virtual_crop_scale[0])
        canvas_w = int(W * self.virtual_crop_scale[1])
        return canvas_h, canvas_w, (canvas_h - H) // 2, (canvas_w - W) // 2

    @staticmethod
    def _pick_bt(B, C, H_pad, W_pad, F_pad, T_tile, cd_itemsize,
                 budget=24 * 2**20, hard_cap=8):
        """Largest divisor of B whose double-buffered per-step footprint fits the
        budget (safe for v7x 64 MiB VMEM), capped at 8, while keeping >= 2 grid
        steps on the batch axis so a 2-TC chip has something to shard."""
        per = 2 * (C * H_pad * W_pad * 4                 # x block (f32)
                   + W_pad * T_tile * cd_itemsize        # wtT block
                   + F_pad * H_pad * cd_itemsize         # wf block
                   + C * F_pad * T_tile * cd_itemsize)   # out block
        cap = max(1, min(hard_cap, budget // max(per, 1)))
        if B >= 2:
            cap = min(cap, max(1, B // 2))
        return _largest_divisor_leq(B, cap)

    def _run(self, wf, wtT, x2, B, C, H_pad, W_pad, F_pad, T_pad, T_tile, Bt, np_cd):
        global _RESOLVED_BATCH_SEM
        candidates = ([_RESOLVED_BATCH_SEM] if _RESOLVED_BATCH_SEM
                      else ["core_parallel", "parallel"])
        last_err = None
        for sem in candidates:
            try:
                fn = _build_resize_call(B, C, H_pad, W_pad, F_pad, T_pad, T_tile,
                                        Bt, np_cd, sem)
                out = jax.block_until_ready(fn(wf, wtT, x2))
                _RESOLVED_BATCH_SEM = sem
                return out
            except Exception as e:  # CORE_PARALLEL not supported -> PARALLEL fallback
                last_err = e
        raise last_err

    def __call__(self, lms):
        single = (lms.ndim == 3)
        if single:
            lms = lms[None]
        B, C, H, W = lms.shape
        canvas_h, canvas_w, y0, x0 = self._canvas_geometry(H, W)

        H_pad = _round_up(H, 8)          # sublane-aligned input rows / wf columns
        F_pad = _round_up(H, 8)          # sublane-dense output rows
        W_pad = _round_up(W, 128)        # lane-aligned MXU contraction dim
        T_pad = _round_up(W, 128)        # lane-dense output columns
        T_tile = _pick_t_tile(T_pad)

        np_cd = np.dtype(self.compute_dtype)

        # Per-sample folded weights: (canvas paste) + (crop) + (bicubic) in one matrix.
        wf_np = np.zeros((B, F_pad, H_pad), np.float32)
        wtT_np = np.zeros((B, W_pad, T_pad), np.float32)
        for b in range(B):
            i, j, h, w = self.get_params((canvas_h, canvas_w), (H, W),
                                         self.time_scale, self.freq_scale)
            wf_np[b, :H, :H] = folded_weight(H, h, i, y0, H)          # (H, H)
            wtT_np[b, :W, :W] = folded_weight(W, w, j, x0, W).T       # (W, W)^T
        # host-side cast before transfer (halves H2D bytes on the bf16 path)
        wf = jnp.asarray(wf_np.astype(np_cd))
        wtT = jnp.asarray(wtT_np.astype(np_cd))

        # Spectrogram stays in its original float dtype; the bf16 cast happens
        # in-kernel on the VPU (avoids a separate XLA convert pass over HBM).
        x = jnp.asarray(lms)
        if not jnp.issubdtype(x.dtype, jnp.floating):
            x = x.astype(jnp.float32)
        if H_pad != H or W_pad != W:
            x = jnp.pad(x, ((0, 0), (0, 0), (0, H_pad - H), (0, W_pad - W)))
        x2 = x.reshape(B, C * H_pad, W_pad)

        Bt = self._pick_bt(B, C, H_pad, W_pad, F_pad, T_tile, np_cd.itemsize)
        out = self._run(wf, wtT, x2, B, C, H_pad, W_pad, F_pad, T_pad, T_tile,
                        Bt, np_cd)
        out = out[:, :, :H, :W]
        return out[0] if single else out


# ----------------------------------------------------------------------------- #
# Pure-numpy reference of the UNFUSED semantics (canvas paste -> crop -> bicubic)
# used to validate the weight folding and the kernel.
# ----------------------------------------------------------------------------- #
def _reference_numpy(lms, params, virtual_crop_scale):
    lms = np.asarray(lms, np.float32)
    B, C, H, W = lms.shape
    canvas_h = int(H * virtual_crop_scale[0])
    canvas_w = int(W * virtual_crop_scale[1])
    y0 = (canvas_h - H) // 2
    x0 = (canvas_w - W) // 2
    out = np.zeros_like(lms)
    for b, (i, j, h, w) in enumerate(params):
        canvas = np.zeros((C, canvas_h, canvas_w), np.float32)
        canvas[:, y0:y0 + H, x0:x0 + W] = lms[b]
        crop = canvas[:, i:i + h, j:j + w]
        Wf = bicubic_weight_matrix(H, h)
        Wt = bicubic_weight_matrix(W, w)
        out[b] = np.einsum('fh,chw,tw->cft', Wf, crop, Wt)
    return out


# ----------------------------------------------------------------------------- #
if __name__ == "__main__":
    key = jax.random.PRNGKey(0)
    x = jax.random.normal(key, (2, 4, 16, 16), dtype=jnp.float32)
    B, C, H, W = x.shape

    # --- exact f32 compute path ------------------------------------------------
    random.seed(0)
    np.random.seed(0)
    rrc_f32 = RandomResizeCrop(compute_dtype=jnp.float32)
    out_f32 = jax.block_until_ready(rrc_f32(x))

    # regenerate the same random crop params
    random.seed(0)
    np.random.seed(0)
    canvas = (int(H * 1.0), int(W * 1.5))
    params = [RandomResizeCrop.get_params(canvas, (H, W), (0.6, 1.5), (0.6, 1.5))
              for _ in range(B)]
    ref = _reference_numpy(np.asarray(x), params, (1.0, 1.5))

    # (a) exact numpy check of the host-side weight folding (no MXU rounding)
    y0 = (canvas[0] - H) // 2
    x0 = (canvas[1] - W) // 2
    fold = np.zeros_like(ref)
    for b, (i, j, h, w) in enumerate(params):
        Wf = folded_weight(H, h, i, y0, H)
        Wt = folded_weight(W, w, j, x0, W)
        fold[b] = np.einsum('fh,chw,tw->cft', Wf, np.asarray(x)[b], Wt)
    assert np.allclose(fold, ref, atol=1e-4, rtol=1e-4), "weight folding mismatch"

    # (b) Pallas kernel, f32 compute path
    assert out_f32.shape == x.shape, (out_f32.shape, x.shape)
    assert out_f32.dtype == jnp.float32
    err32 = float(np.max(np.abs(np.asarray(out_f32) - ref)))
    assert np.isfinite(err32) and err32 < 5e-2, err32

    # (c) default path: bf16 operands, f32 accumulation, bf16 output
    random.seed(0)
    np.random.seed(0)
    rrc = RandomResizeCrop()                      # compute_dtype=bfloat16
    out_bf16 = jax.block_until_ready(rrc(x))
    assert out_bf16.shape == x.shape, (out_bf16.shape, x.shape)
    assert out_bf16.dtype == jnp.bfloat16
    err_bf = float(np.max(np.abs(np.asarray(out_bf16.astype(jnp.float32)) - ref)))
    assert np.isfinite(err_bf) and err_bf < 0.25, err_bf

    print("KERNEL_OK")
</pallas_src>

<mosaic_0001>
module attributes {stable_mosaic.version = 11 : i64} {
  func.func @kernel(%arg0: i32, %arg1: i32, %arg2: memref<1x16x16xf32, #tpu.memory_space<vmem>>, %arg3: memref<1x128x128xf32, #tpu.memory_space<vmem>>, %arg4: memref<1x64x128xf32, #tpu.memory_space<vmem>>, %arg5: memref<1x4x16x128xf32, #tpu.memory_space<vmem>>) attributes {dimension_semantics = [#tpu.dimension_semantics<core_parallel>, #tpu.dimension_semantics<arbitrary>], iteration_bounds = array<i64: 2, 1>, scalar_prefetch = 0 : i64, scratch_operands = 0 : i64, tpu.core_type = #tpu.core_type<tc>, window_params = [{transform_indices = @transform_0, window_bounds = array<i64: 1, 16, 16>}, {transform_indices = @transform_1, window_bounds = array<i64: 1, 128, 128>}, {transform_indices = @transform_2, window_bounds = array<i64: 1, 64, 128>}, {transform_indices = @transform_3, window_bounds = array<i64: 1, 4, 16, 128>}]} {
    %c0 = arith.constant 0 : index
    %c0_0 = arith.constant 0 : index
    %c0_1 = arith.constant 0 : index
    %0 = vector.load %arg4[%c0, %c0_0, %c0_1] : memref<1x64x128xf32, #tpu.memory_space<vmem>>, vector<1x64x128xf32>
    %1 = vector.shape_cast %0 : vector<1x64x128xf32> to vector<64x128xf32>
    %c0_2 = arith.constant 0 : index
    %c0_3 = arith.constant 0 : index
    %c0_4 = arith.constant 0 : index
    %2 = vector.load %arg3[%c0_2, %c0_3, %c0_4] : memref<1x128x128xf32, #tpu.memory_space<vmem>>, vector<1x128x128xf32>
    %3 = vector.shape_cast %2 : vector<1x128x128xf32> to vector<128x128xf32>
    %cst = arith.constant dense<0.000000e+00> : vector<64x128xf32>
    %4 = tpu.matmul %1, %3, %cst {dimension_numbers = #tpu.dot_dimension_numbers<[1], [0], [0], [1], [0, 0, 1, 1], [], []>} : vector<64x128xf32>, vector<128x128xf32>, vector<64x128xf32> -> vector<64x128xf32>
    %c0_5 = arith.constant 0 : index
    %c0_6 = arith.constant 0 : index
    %c0_7 = arith.constant 0 : index
    %5 = vector.load %arg2[%c0_5, %c0_6, %c0_7] : memref<1x16x16xf32, #tpu.memory_space<vmem>>, vector<1x16x16xf32>
    %6 = vector.shape_cast %5 : vector<1x16x16xf32> to vector<16x16xf32>
    %7 = vector.extract_strided_slice %4 {offsets = [0, 0], sizes = [16, 128], strides = [1, 1]} : vector<64x128xf32> to vector<16x128xf32>
    %cst_8 = arith.constant dense<0.000000e+00> : vector<16x128xf32>
    %8 = tpu.matmul %6, %7, %cst_8 {dimension_numbers = #tpu.dot_dimension_numbers<[1], [0], [0], [1], [0, 0, 1, 1], [], []>} : vector<16x16xf32>, vector<16x128xf32>, vector<16x128xf32> -> vector<16x128xf32>
    %c0_9 = arith.constant 0 : index
    %c0_10 = arith.constant 0 : index
    %c0_11 = arith.constant 0 : index
    %c0_12 = arith.constant 0 : index
    %9 = vector.load %arg5[%c0_9, %c0_10, %c0_11, %c0_12] : memref<1x4x16x128xf32, #tpu.memory_space<vmem>>, vector<1x1x16x128xf32>
    %10 = vector.shape_cast %9 : vector<1x1x16x128xf32> to vector<16x128xf32>
    %11 = vector.shape_cast %8 : vector<16x128xf32> to vector<1x1x16x128xf32>
    tpu.vector_store %arg5[%c0_9, %c0_10, %c0_11, %c0_12], %11 {strides = array<i32>} : memref<1x4x16x128xf32, #tpu.memory_space<vmem>>, vector<1x1x16x128xf32>,
    %12 = vector.extract_strided_slice %4 {offsets = [16, 0], sizes = [16, 128], strides = [1, 1]} : vector<64x128xf32> to vector<16x128xf32>
    %cst_13 = arith.constant dense<0.000000e+00> : vector<16x128xf32>
    %13 = tpu.matmul %6, %12, %cst_13 {dimension_numbers = #tpu.dot_dimension_numbers<[1], [0], [0], [1], [0, 0, 1, 1], [], []>} : vector<16x16xf32>, vector<16x128xf32>, vector<16x128xf32> -> vector<16x128xf32>
    %c0_14 = arith.constant 0 : index
    %c1 = arith.constant 1 : index
    %c0_15 = arith.constant 0 : index
    %c0_16 = arith.constant 0 : index
    %14 = vector.load %arg5[%c0_14, %c1, %c0_15, %c0_16] : memref<1x4x16x128xf32, #tpu.memory_space<vmem>>, vector<1x1x16x128xf32>
    %15 = vector.shape_cast %14 : vector<1x1x16x128xf32> to vector<16x128xf32>
    %16 = vector.shape_cast %13 : vector<16x128xf32> to vector<1x1x16x128xf32>
    tpu.vector_store %arg5[%c0_14, %c1, %c0_15, %c0_16], %16 {strides = array<i32>} : memref<1x4x16x128xf32, #tpu.memory_space<vmem>>, vector<1x1x16x128xf32>,
    %17 = vector.extract_strided_slice %4 {offsets = [32, 0], sizes = [16, 128], strides = [1, 1]} : vector<64x128xf32> to vector<16x128xf32>
    %cst_17 = arith.constant dense<0.000000e+00> : vector<16x128xf32>
    %18 = tpu.matmul %6, %17, %cst_17 {dimension_numbers = #tpu.dot_dimension_numbers<[1], [0], [0], [1], [0, 0, 1, 1], [], []>} : vector<16x16xf32>, vector<16x128xf32>, vector<16x128xf32> -> vector<16x128xf32>
    %c0_18 = arith.constant 0 : index
    %c2 = arith.constant 2 : index
    %c0_19 = arith.constant 0 : index
    %c0_20 = arith.constant 0 : index
    %19 = vector.load %arg5[%c0_18, %c2, %c0_19, %c0_20] : memref<1x4x16x128xf32, #tpu.memory_space<vmem>>, vector<1x1x16x128xf32>
    %20 = vector.shape_cast %19 : vector<1x1x16x128xf32> to vector<16x128xf32>
    %21 = vector.shape_cast %18 : vector<16x128xf32> to vector<1x1x16x128xf32>
    tpu.vector_store %arg5[%c0_18, %c2, %c0_19, %c0_20], %21 {strides = array<i32>} : memref<1x4x16x128xf32, #tpu.memory_space<vmem>>, vector<1x1x16x128xf32>,
    %22 = vector.extract_strided_slice %4 {offsets = [48, 0], sizes = [16, 128], strides = [1, 1]} : vector<64x128xf32> to vector<16x128xf32>
    %cst_21 = arith.constant dense<0.000000e+00> : vector<16x128xf32>
    %23 = tpu.matmul %6, %22, %cst_21 {dimension_numbers = #tpu.dot_dimension_numbers<[1], [0], [0], [1], [0, 0, 1, 1], [], []>} : vector<16x16xf32>, vector<16x128xf32>, vector<16x128xf32> -> vector<16x128xf32>
    %c0_22 = arith.constant 0 : index
    %c3 = arith.constant 3 : index
    %c0_23 = arith.constant 0 : index
    %c0_24 = arith.constant 0 : index
    %24 = vector.load %arg5[%c0_22, %c3, %c0_23, %c0_24] : memref<1x4x16x128xf32, #tpu.memory_space<vmem>>, vector<1x1x16x128xf32>
    %25 = vector.shape_cast %24 : vector<1x1x16x128xf32> to vector<16x128xf32>
    %26 = vector.shape_cast %23 : vector<16x128xf32> to vector<1x1x16x128xf32>
    tpu.vector_store %arg5[%c0_22, %c3, %c0_23, %c0_24], %26 {strides = array<i32>} : memref<1x4x16x128xf32, #tpu.memory_space<vmem>>, vector<1x1x16x128xf32>,
    return
  }
  func.func @transform_0(%arg0: i32, %arg1: i32) -> (i32, i32, i32) {
    %c0_i32 = arith.constant 0 : i32
    %c0_i32_0 = arith.constant 0 : i32
    %c0_i32_1 = arith.constant 0 : i32
    return %arg0, %c0_i32, %c0_i32_0 : i32, i32, i32
  }
  func.func @transform_1(%arg0: i32, %arg1: i32) -> (i32, i32, i32) {
    %c0_i32 = arith.constant 0 : i32
    %c0_i32_0 = arith.constant 0 : i32
    return %arg0, %c0_i32, %arg1 : i32, i32, i32
  }
  func.func @transform_2(%arg0: i32, %arg1: i32) -> (i32, i32, i32) {
    %c0_i32 = arith.constant 0 : i32
    %c0_i32_0 = arith.constant 0 : i32
    %c0_i32_1 = arith.constant 0 : i32
    return %arg0, %c0_i32, %c0_i32_0 : i32, i32, i32
  }
  func.func @transform_3(%arg0: i32, %arg1: i32) -> (i32, i32, i32, i32) {
    %c0_i32 = arith.constant 0 : i32
    %c0_i32_0 = arith.constant 0 : i32
    %c0_i32_1 = arith.constant 0 : i32
    return %arg0, %c0_i32, %c0_i32_0, %arg1 : i32, i32, i32, i32
  }
}

module attributes {stable_mosaic.version = 11 : i64} {
  func.func @kernel(%arg0: i32, %arg1: i32, %arg2: memref<1x16x16xf32, #tpu.memory_space<vmem>>, %arg3: memref<1x128x128xf32, #tpu.memory_space<vmem>>, %arg4: memref<1x64x128xf32, #tpu.memory_space<vmem>>, %arg5: memref<1x4x16x128xf32, #tpu.memory_space<vmem>>) attributes {dimension_semantics = [#tpu.dimension_semantics<parallel>, #tpu.dimension_semantics<arbitrary>], iteration_bounds = array<i64: 2, 1>, scalar_prefetch = 0 : i64, scratch_operands = 0 : i64, tpu.core_type = #tpu.core_type<tc>, window_params = [{transform_indices = @transform_0, window_bounds = array<i64: 1, 16, 16>}, {transform_indices = @transform_1, window_bounds = array<i64: 1, 128, 128>}, {transform_indices = @transform_2, window_bounds = array<i64: 1, 64, 128>}, {transform_indices = @transform_3, window_bounds = array<i64: 1, 4, 16, 128>}]} {
    %c0 = arith.constant 0 : index
    %c0_0 = arith.constant 0 : index
    %c0_1 = arith.constant 0 : index
    %0 = vector.load %arg4[%c0, %c0_0, %c0_1] : memref<1x64x128xf32, #tpu.memory_space<vmem>>, vector<1x64x128xf32>
    %1 = vector.shape_cast %0 : vector<1x64x128xf32> to vector<64x128xf32>
    %c0_2 = arith.constant 0 : index
    %c0_3 = arith.constant 0 : index
    %c0_4 = arith.constant 0 : index
    %2 = vector.load %arg3[%c0_2, %c0_3, %c0_4] : memref<1x128x128xf32, #tpu.memory_space<vmem>>, vector<1x128x128xf32>
    %3 = vector.shape_cast %2 : vector<1x128x128xf32> to vector<128x128xf32>
    %cst = arith.constant dense<0.000000e+00> : vector<64x128xf32>
    %4 = tpu.matmul %1, %3, %cst {dimension_numbers = #tpu.dot_dimension_numbers<[1], [0], [0], [1], [0, 0, 1, 1], [], []>} : vector<64x128xf32>, vector<128x128xf32>, vector<64x128xf32> -> vector<64x128xf32>
    %c0_5 = arith.constant 0 : index
    %c0_6 = arith.constant 0 : index
    %c0_7 = arith.constant 0 : index
    %5 = vector.load %arg2[%c0_5, %c0_6, %c0_7] : memref<1x16x16xf32, #tpu.memory_space<vmem>>, vector<1x16x16xf32>
    %6 = vector.shape_cast %5 : vector<1x16x16xf32> to vector<16x16xf32>
    %7 = vector.extract_strided_slice %4 {offsets = [0, 0], sizes = [16, 128], strides = [1, 1]} : vector<64x128xf32> to vector<16x128xf32>
    %cst_8 = arith.constant dense<0.000000e+00> : vector<16x128xf32>
    %8 = tpu.matmul %6, %7, %cst_8 {dimension_numbers = #tpu.dot_dimension_numbers<[1], [0], [0], [1], [0, 0, 1, 1], [], []>} : vector<16x16xf32>, vector<16x128xf32>, vector<16x128xf32> -> vector<16x128xf32>
    %c0_9 = arith.constant 0 : index
    %c0_10 = arith.constant 0 : index
    %c0_11 = arith.constant 0 : index
    %c0_12 = arith.constant 0 : index
    %9 = vector.load %arg5[%c0_9, %c0_10, %c0_11, %c0_12] : memref<1x4x16x128xf32, #tpu.memory_space<vmem>>, vector<1x1x16x128xf32>
    %10 = vector.shape_cast %9 : vector<1x1x16x128xf32> to vector<16x128xf32>
    %11 = vector.shape_cast %8 : vector<16x128xf32> to vector<1x1x16x128xf32>
    tpu.vector_store %arg5[%c0_9, %c0_10, %c0_11, %c0_12], %11 {strides = array<i32>} : memref<1x4x16x128xf32, #tpu.memory_space<vmem>>, vector<1x1x16x128xf32>,
    %12 = vector.extract_strided_slice %4 {offsets = [16, 0], sizes = [16, 128], strides = [1, 1]} : vector<64x128xf32> to vector<16x128xf32>
    %cst_13 = arith.constant dense<0.000000e+00> : vector<16x128xf32>
    %13 = tpu.matmul %6, %12, %cst_13 {dimension_numbers = #tpu.dot_dimension_numbers<[1], [0], [0], [1], [0, 0, 1, 1], [], []>} : vector<16x16xf32>, vector<16x128xf32>, vector<16x128xf32> -> vector<16x128xf32>
    %c0_14 = arith.constant 0 : index
    %c1 = arith.constant 1 : index
    %c0_15 = arith.constant 0 : index
    %c0_16 = arith.constant 0 : index
    %14 = vector.load %arg5[%c0_14, %c1, %c0_15, %c0_16] : memref<1x4x16x128xf32, #tpu.memory_space<vmem>>, vector<1x1x16x128xf32>
    %15 = vector.shape_cast %14 : vector<1x1x16x128xf32> to vector<16x128xf32>
    %16 = vector.shape_cast %13 : vector<16x128xf32> to vector<1x1x16x128xf32>
    tpu.vector_store %arg5[%c0_14, %c1, %c0_15, %c0_16], %16 {strides = array<i32>} : memref<1x4x16x128xf32, #tpu.memory_space<vmem>>, vector<1x1x16x128xf32>,
    %17 = vector.extract_strided_slice %4 {offsets = [32, 0], sizes = [16, 128], strides = [1, 1]} : vector<64x128xf32> to vector<16x128xf32>
    %cst_17 = arith.constant dense<0.000000e+00> : vector<16x128xf32>
    %18 = tpu.matmul %6, %17, %cst_17 {dimension_numbers = #tpu.dot_dimension_numbers<[1], [0], [0], [1], [0, 0, 1, 1], [], []>} : vector<16x16xf32>, vector<16x128xf32>, vector<16x128xf32> -> vector<16x128xf32>
    %c0_18 = arith.constant 0 : index
    %c2 = arith.constant 2 : index
    %c0_19 = arith.constant 0 : index
    %c0_20 = arith.constant 0 : index
    %19 = vector.load %arg5[%c0_18, %c2, %c0_19, %c0_20] : memref<1x4x16x128xf32, #tpu.memory_space<vmem>>, vector<1x1x16x128xf32>
    %20 = vector.shape_cast %19 : vector<1x1x16x128xf32> to vector<16x128xf32>
    %21 = vector.shape_cast %18 : vector<16x128xf32> to vector<1x1x16x128xf32>
    tpu.vector_store %arg5[%c0_18, %c2, %c0_19, %c0_20], %21 {strides = array<i32>} : memref<1x4x16x128xf32, #tpu.memory_space<vmem>>, vector<1x1x16x128xf32>,
    %22 = vector.extract_strided_slice %4 {offsets = [48, 0], sizes = [16, 128], strides = [1, 1]} : vector<64x128xf32> to vector<16x128xf32>
    %cst_21 = arith.constant dense<0.000000e+00> : vector<16x128xf32>
    %23 = tpu.matmul %6, %22, %cst_21 {dimension_numbers = #tpu.dot_dimension_numbers<[1], [0], [0], [1], [0, 0, 1, 1], [], []>} : vector<16x16xf32>, vector<16x128xf32>, vector<16x128xf32> -> vector<16x128xf32>
    %c0_22 = arith.constant 0 : index
    %c3 = arith.constant 3 : index
    %c0_23 = arith.constant 0 : index
    %c0_24 = arith.constant 0 : index
    %24 = vector.load %arg5[%c0_22, %c3, %c0_23, %c0_24] : memref<1x4x16x128xf32, #tpu.memory_space<vmem>>, vector<1x1x16x128xf32>
    %25 = vector.shape_cast %24 : vector<1x1x16x128xf32> to vector<16x128xf32>
    %26 = vector.shape_cast %23 : vector<16x128xf32> to vector<1x1x16x128xf32>
    tpu.vector_store %arg5[%c0_22, %c3, %c0_23, %c0_24], %26 {strides = array<i32>} : memref<1x4x16x128xf32, #tpu.memory_space<vmem>>, vector<1x1x16x128xf32>,
    return
  }
  func.func @transform_0(%arg0: i32, %arg1: i32) -> (i32, i32, i32) {
    %c0_i32 = arith.constant 0 : i32
    %c0_i32_0 = arith.constant 0 : i32
    %c0_i32_1 = arith.constant 0 : i32
    return %arg0, %c0_i32, %c0_i32_0 : i32, i32, i32
  }
  func.func @transform_1(%arg0: i32, %arg1: i32) -> (i32, i32, i32) {
    %c0_i32 = arith.constant 0 : i32
    %c0_i32_0 = arith.constant 0 : i32
    return %arg0, %c0_i32, %arg1 : i32, i32, i32
  }
  func.func @transform_2(%arg0: i32, %arg1: i32) -> (i32, i32, i32) {
    %c0_i32 = arith.constant 0 : i32
    %c0_i32_0 = arith.constant 0 : i32
    %c0_i32_1 = arith.constant 0 : i32
    return %arg0, %c0_i32, %c0_i32_0 : i32, i32, i32
  }
  func.func @transform_3(%arg0: i32, %arg1: i32) -> (i32, i32, i32, i32) {
    %c0_i32 = arith.constant 0 : i32
    %c0_i32_0 = arith.constant 0 : i32
    %c0_i32_1 = arith.constant 0 : i32
    return %arg0, %c0_i32, %c0_i32_0, %arg1 : i32, i32, i32, i32
  }
}

</mosaic_0001>

<llo_original>
// kernel: tpu_custom_call.1
$region0: #{tpu_custom_call.1}
  #allocation0 [shape = 'u32[]', space=smem, size = 0x4, offset = 0x4, fixed_abs, tag = 'smem constant byte address 0x4 - core index']
  #allocation1 [shape = 'u32[144,128]{1,0:T(1,128)}', space=vmem, size = 0x12000, scoped, tag = 'internal scratch']
  %s0 = inlined_call_operand.hbm [shape: f32[2,16,16], index: 0, kind: input, shape index: {}]
  %s1 = inlined_call_operand.hbm [shape: f32[2,128,128], index: 1, kind: input, shape index: {}]
  %s2 = inlined_call_operand.hbm [shape: f32[2,64,128], index: 2, kind: input, shape index: {}]
  %s3 = inlined_call_operand.hbm [shape: f32[2,4,16,128], index: 3, kind: output, shape index: {}]
  %s4 = sld [smem:[#allocation0]]
  $region57: #{tpu_custom_call.1} parent=0
    _
  %s6 = ssub.s32 1, %s4
  %s7 = scalar_select 0, %s6, %s4
  $region1: #{tpu_custom_call.1} parent=0
    #allocation2 [shape = 'u8[16384]{0}', space=vmem, size = 0x4000, scoped, tag = 'input window, operand 0']
    #allocation3 [shape = 's32[2]{0}', space=sflag, size = 0x8, scoped, tag = 'scoped memory for tpu_custom_call.1']
    #allocation4 [shape = 's32[2]{0}', space=sflag, size = 0x8, scoped, tag = 'scoped memory for tpu_custom_call.1']
    #allocation5 [shape = 'u8[131072]{0}', space=vmem, size = 0x20000, scoped, tag = 'input window, operand 1']
    #allocation6 [shape = 's32[2]{0}', space=sflag, size = 0x8, scoped, tag = 'scoped memory for tpu_custom_call.1']
    #allocation7 [shape = 'u8[65536]{0}', space=vmem, size = 0x10000, scoped, tag = 'input window, operand 2']
    #allocation8 [shape = 'u8[65536]{0}', space=vmem, size = 0x10000, scoped, tag = 'output window, operand 0']
    %8 = vsyncpa [#allocation3], 0
    %s9 = scalar_lea.sflag [#allocation3], 1
    %10 = vsyncpa %s9, 0
    %11 = vsyncpa [#allocation6], 0
    %s12 = scalar_lea.sflag [#allocation6], 1
    %13 = vsyncpa %s12, 0
    %14 = vsyncpa [#allocation4], 0
    %s15 = scalar_lea.sflag [#allocation4], 1
    %16 = vsyncpa %s15, 0
    loop: start=0, step=1, limit=4
    $region2: #{tpu_custom_call.1} parent=1 // loop_pre_header
      _
    $region3: #{tpu_custom_call.1} parent=1 // loop_header
      %s18 = sphi 0, %s22
      %p19 = scmp.ge.s32.totalorder %s18, 4
      %s25 = sphi 0, %s37
      %s26 = sphi 0, %s33
      %s27 = sphi 0, %s25
      %s28 = sphi 0, %s26
      %s29 = sphi 0, %s27
      %s30 = sphi 0, %s28
      %s40 = sphi 0, %s42
      %s43 = sphi 0, %s40
      %s44 = sphi 0, %s43
      %s60 = sphi 0, %s44
      %s68 = sphi 0, %s70
      %s71 = sphi 0, %s68
      %s72 = sphi 0, %s71
      %s88 = sphi 0, %s72
      %s94 = sphi 0, %s96
      %s97 = sphi 0, %s94
      %s98 = sphi 0, %s97
      %s114 = sphi 0, %s98
      %s122 = sphi 0, %s124
      %s125 = sphi 0, %s122
      %s126 = sphi 0, %s125
      %s142 = sphi 0, %s126
    $region4: #{tpu_custom_call.1} parent=1 // loop_header_branch
      %21 = sbr.rel (%p19) target = $region8
    $region5: #{tpu_custom_call.1} parent=1 // loop_body
      %s23 = ssub.s32 %s18, 1
      %s24 = ssub.s32 %s18, 2
      %s31 = sadd.s32 1, %s26
      %p32 = scmp.ge.s32.totalorder %s31, 1
      %s33 = scalar_select %p32, 0, %s31
      %s34 = sadd.s32 1, %s25
      %s35 = scalar_select %p32, %s34, %s25
      %p36 = scmp.ge.s32.totalorder %s35, 2
      %s37 = scalar_select %p36, 0, %s35
      %s38 = ssub.s32 %s25, %s37
      %p39 = scmp.eq.s32.totalorder %s38, 0
      %s41 = sadd.s32 %s40, 1
      %s42 = scalar_select %p39, %s40, %s41
      %p45 = pneg %p39
      %p46 = scmp.eq.s32.totalorder %s18, 1
      %p47 = por %p45, %p46
      %p48 = scmp.ne.s32.totalorder %s40, %s43
      %p49 = scmp.eq.s32.totalorder %s18, 0
      %p50 = por %p48, %p49
      %p51 = scmp.ne.s32.totalorder %s40, %s43
      %p52 = scmp.eq.s32.totalorder %s23, 1
      %p53 = por %p51, %p52
      %p54 = scmp.ne.s32.totalorder %s43, %s44
      %p55 = scmp.eq.s32.totalorder %s23, 0
      %p56 = por %p54, %p55
      %p57 = scmp.ne.s32.totalorder %s43, %s44
      %p58 = scmp.eq.s32.totalorder %s24, 1
      %p59 = por %p57, %p58
      %p61 = scmp.ne.s32.totalorder %s44, %s60
      %p62 = scmp.eq.s32.totalorder %s24, 0
      %p63 = por %p61, %p62
      %s64 = ssub.s32 %s25, %s37
      %s65 = ssub.s32 %s26, %s33
      %s66 = sor.u32 %s64, %s65
      %p67 = scmp.eq.s32.totalorder %s66, 0
      %s69 = sadd.s32 %s68, 1
      %s70 = scalar_select %p67, %s68, %s69
      %p73 = pneg %p67
      %p74 = scmp.eq.s32.totalorder %s18, 1
      %p75 = por %p73, %p74
      %p76 = scmp.ne.s32.totalorder %s68, %s71
      %p77 = scmp.eq.s32.totalorder %s18, 0
      %p78 = por %p76, %p77
      %p79 = scmp.ne.s32.totalorder %s68, %s71
      %p80 = scmp.eq.s32.totalorder %s23, 1
      %p81 = por %p79, %p80
      %p82 = scmp.ne.s32.totalorder %s71, %s72
      %p83 = scmp.eq.s32.totalorder %s23, 0
      %p84 = por %p82, %p83
      %p85 = scmp.ne.s32.totalorder %s71, %s72
      %p86 = scmp.eq.s32.totalorder %s24, 1
      %p87 = por %p85, %p86
      %p89 = scmp.ne.s32.totalorder %s72, %s88
      %p90 = scmp.eq.s32.totalorder %s24, 0
      %p91 = por %p89, %p90
      %s92 = ssub.s32 %s25, %s37
      %p93 = scmp.eq.s32.totalorder %s92, 0
      %s95 = sadd.s32 %s94, 1
      %s96 = scalar_select %p93, %s94, %s95
      %p99 = pneg %p93
      %p100 = scmp.eq.s32.totalorder %s18, 1
      %p101 = por %p99, %p100
      %p102 = scmp.ne.s32.totalorder %s94, %s97
      %p103 = scmp.eq.s32.totalorder %s18, 0
      %p104 = por %p102, %p103
      %p105 = scmp.ne.s32.totalorder %s94, %s97
      %p106 = scmp.eq.s32.totalorder %s23, 1
      %p107 = por %p105, %p106
      %p108 = scmp.ne.s32.totalorder %s97, %s98
      %p109 = scmp.eq.s32.totalorder %s23, 0
      %p110 = por %p108, %p109
      %p111 = scmp.ne.s32.totalorder %s97, %s98
      %p112 = scmp.eq.s32.totalorder %s24, 1
      %p113 = por %p111, %p112
      %p115 = scmp.ne.s32.totalorder %s98, %s114
      %p116 = scmp.eq.s32.totalorder %s24, 0
      %p117 = por %p115, %p116
      %s118 = ssub.s32 %s25, %s37
      %s119 = ssub.s32 %s26, %s33
      %s120 = sor.u32 %s118, %s119
      %p121 = scmp.eq.s32.totalorder %s120, 0
      %s123 = sadd.s32 %s122, 1
      %s124 = scalar_select %p121, %s122, %s123
      %p127 = pneg %p121
      %p128 = scmp.eq.s32.totalorder %s18, 1
      %p129 = por %p127, %p128
      %p130 = scmp.ne.s32.totalorder %s122, %s125
      %p131 = scmp.eq.s32.totalorder %s18, 0
      %p132 = por %p130, %p131
      %p133 = scmp.ne.s32.totalorder %s122, %s125
      %p134 = scmp.eq.s32.totalorder %s23, 1
      %p135 = por %p133, %p134
      %p136 = scmp.ne.s32.totalorder %s125, %s126
      %p137 = scmp.eq.s32.totalorder %s23, 0
      %p138 = por %p136, %p137
      %p139 = scmp.ne.s32.totalorder %s125, %s126
      %p140 = scmp.eq.s32.totalorder %s24, 1
      %p141 = por %p139, %p140
      %p143 = scmp.ne.s32.totalorder %s126, %s142
      %p144 = scmp.eq.s32.totalorder %s24, 0
      %p145 = por %p143, %p144
      %p146 = scmp.le.s32.totalorder 1, %s18
      %p147 = scmp.lt.s32.totalorder %s18, 3
      %p148 = pnand %p146, %p147
      %p149 = pneg %p148
      // Predicated region
      $region9: #{tpu_custom_call.1} parent=5 // pred_check
        _
      $region10: #{tpu_custom_call.1} parent=5 // pred_check_branch
        %151 = sbr.rel (%p148) target = $region12
      $region11: #{tpu_custom_call.1} parent=5 // pred_region
        %s152 = ssub.s32 %s18, 1
      $region12: #{tpu_custom_call.1} parent=5 // pred_fallthru
        _
      %p153 = scmp.lt.s32.totalorder %s18, 2
      // Predicated region
      $region13: #{tpu_custom_call.1} parent=5 // pred_check
        %p154 = pneg %p153
      $region14: #{tpu_custom_call.1} parent=5 // pred_check_branch
        %156 = sbr.rel (%p154) target = $region16
      $region15: #{tpu_custom_call.1} parent=5 // pred_region
        // Predicated region
        $region17: #{tpu_custom_call.1} parent=15 // pred_check
          %p157 = pneg %p50
        $region18: #{tpu_custom_call.1} parent=15 // pred_check_branch
          %159 = sbr.rel (%p157) target = $region20
        $region19: #{tpu_custom_call.1} parent=15 // pred_region
          %s160 = sand.u32 %s40, 1
          %s161 = scalar_lea.sflag [#allocation3], %s160
          %s162 = sand.u32 %s40, 1
          %s163 = smul.addr %s162, 16
          %s164 = scalar_lea.vmem [#allocation2], %s163
          %s166 = ssub.s32 256, 256
          %167 = vsyncadd %s161, %s166
          %s168 = smul.addr %s25, 2
          %s169 = smul.addr %s168, 128
          %s170 = scalar_lea.hbm %s0, %s169
          %s171 = sshll.u32 %s164, 4
          %s172 = int_to_ptr.vmem [resolvable:$true] %s171
          %177 = dma.hbm_to_vmem [thread:$0]  %s170, 256, %s172, %s161, 128, 128, 8
        $region20: #{tpu_custom_call.1} parent=15 // pred_fallthru
          _
        // Predicated region
        $region21: #{tpu_custom_call.1} parent=15 // pred_check
          %p178 = pneg %p78
        $region22: #{tpu_custom_call.1} parent=15 // pred_check_branch
          %180 = sbr.rel (%p178) target = $region24
        $region23: #{tpu_custom_call.1} parent=15 // pred_region
          %s181 = sand.u32 %s18, 1
          %s182 = scalar_lea.sflag [#allocation6], %s181
          %s183 = sand.u32 %s68, 1
          %s184 = smul.addr %s183, 128
          %s185 = scalar_lea.vmem [#allocation5], %s184
          %s187 = ssub.s32 2048, 2048
          %188 = vsyncadd %s182, %s187
          %s189 = smul.addr %s25, 16
          %s190 = sadd.s32 %s26, %s189
          %s191 = smul.addr %s190, 128
          %s192 = scalar_lea.hbm %s1, %s191
          %s193 = sshll.u32 %s185, 4
          %s194 = int_to_ptr.vmem [resolvable:$true] %s193
          %199 = dma.hbm_to_vmem [thread:$0]  %s192, 2048, %s194, %s182, 128, 128, 8
        $region24: #{tpu_custom_call.1} parent=15 // pred_fallthru
          _
        // Predicated region
        $region25: #{tpu_custom_call.1} parent=15 // pred_check
          %p200 = pneg %p104
        $region26: #{tpu_custom_call.1} parent=15 // pred_check_branch
          %202 = sbr.rel (%p200) target = $region28
        $region27: #{tpu_custom_call.1} parent=15 // pred_region
          %s203 = sand.u32 %s18, 1
          %s204 = scalar_lea.sflag [#allocation6], %s203
          %s205 = sand.u32 %s94, 1
          %s206 = smul.addr %s205, 64
          %s207 = scalar_lea.vmem [#allocation7], %s206
          %s209 = ssub.s32 1024, 1024
          %210 = vsyncadd %s204, %s209
          %s211 = smul.addr %s25, 8
          %s212 = smul.addr %s211, 128
          %s213 = scalar_lea.hbm %s2, %s212
          %s214 = sshll.u32 %s207, 4
          %s215 = int_to_ptr.vmem [resolvable:$true] %s214
          %220 = dma.hbm_to_vmem [thread:$0]  %s213, 1024, %s215, %s204, 128, 128, 8
        $region28: #{tpu_custom_call.1} parent=15 // pred_fallthru
          _
      $region16: #{tpu_custom_call.1} parent=5 // pred_fallthru
        _
      %p221 = scmp.le.s32.totalorder 1, %s18
      %p222 = scmp.lt.s32.totalorder %s18, 3
      %p223 = pnand %p221, %p222
      %p224 = pneg %p223
      // Predicated region
      $region29: #{tpu_custom_call.1} parent=5 // pred_check
        _
      $region30: #{tpu_custom_call.1} parent=5 // pred_check_branch
        %226 = sbr.rel (%p223) target = $region32
      $region31: #{tpu_custom_call.1} parent=5 // pred_region
        %s227 = ssub.s32 %s18, 1
        %s228 = sand.u32 %s43, 1
        %s229 = scalar_lea.sflag [#allocation3], %s228
        %s230 = sand.u32 %s43, 1
        %s231 = smul.addr %s230, 16
        %s232 = scalar_lea.vmem [#allocation2], %s231
        // Predicated region
        $region33: #{tpu_custom_call.1} parent=31 // pred_check
          %p233 = pneg %p56
        $region34: #{tpu_custom_call.1} parent=31 // pred_check_branch
          %235 = sbr.rel (%p233) target = $region36
        $region35: #{tpu_custom_call.1} parent=31 // pred_region
          %236 = dma.done %s229, 256
        $region36: #{tpu_custom_call.1} parent=31 // pred_fallthru
          _
        %s237 = sand.u32 %s23, 1
        %s238 = scalar_lea.sflag [#allocation6], %s237
        %s239 = sand.u32 %s71, 1
        %s240 = smul.addr %s239, 128
        %s241 = scalar_lea.vmem [#allocation5], %s240
        // Predicated region
        $region37: #{tpu_custom_call.1} parent=31 // pred_check
          %p242 = pneg %p84
        $region38: #{tpu_custom_call.1} parent=31 // pred_check_branch
          %244 = sbr.rel (%p242) target = $region40
        $region39: #{tpu_custom_call.1} parent=31 // pred_region
          %245 = dma.done %s238, 2048
        $region40: #{tpu_custom_call.1} parent=31 // pred_fallthru
          _
        %s246 = sand.u32 %s23, 1
        %s247 = scalar_lea.sflag [#allocation6], %s246
        %s248 = sand.u32 %s97, 1
        %s249 = smul.addr %s248, 64
        %s250 = scalar_lea.vmem [#allocation7], %s249
        // Predicated region
        $region41: #{tpu_custom_call.1} parent=31 // pred_check
          %p251 = pneg %p110
        $region42: #{tpu_custom_call.1} parent=31 // pred_check_branch
          %253 = sbr.rel (%p251) target = $region44
        $region43: #{tpu_custom_call.1} parent=31 // pred_region
          %254 = dma.done %s247, 1024
        $region44: #{tpu_custom_call.1} parent=31 // pred_fallthru
          _
        %s255 = sand.u32 %s43, 1
        %s256 = scalar_lea.sflag [#allocation3], %s255
        %s257 = sand.u32 %s43, 1
        %s258 = smul.addr %s257, 16
        %s259 = scalar_lea.vmem [#allocation2], %s258
        %p260 = pneg %p56
        %p261 = pneg %p53
        %s262 = sand.u32 %s23, 1
        %s263 = scalar_lea.sflag [#allocation6], %s262
        %s264 = sand.u32 %s71, 1
        %s265 = smul.addr %s264, 128
        %s266 = scalar_lea.vmem [#allocation5], %s265
        %p267 = pneg %p84
        %p268 = pneg %p81
        %s269 = sand.u32 %s23, 1
        %s270 = scalar_lea.sflag [#allocation6], %s269
        %s271 = sand.u32 %s97, 1
        %s272 = smul.addr %s271, 64
        %s273 = scalar_lea.vmem [#allocation7], %s272
        %p274 = pneg %p110
        %p275 = pneg %p107
        %p276 = pneg %p138
        %p277 = pneg %p135
        %s278 = sand.u32 %s125, 1
        %s279 = scalar_lea.sflag [#allocation4], %s278
        %s280 = sand.u32 %s125, 1
        %s281 = smul.addr %s280, 64
        %s282 = scalar_lea.vmem [#allocation8], %s281
        %v283 = vld [vmem:[%s250] sm:$0xff]
        %v284 = vld [vmem:[%s250 + $0x8] sm:$0xff]
        %v285 = vld [vmem:[%s250 + $0x10] sm:$0xff]
        %v286 = vld [vmem:[%s250 + $0x18] sm:$0xff]
        %v287 = vld [vmem:[%s250 + $0x20] sm:$0xff]
        %v288 = vld [vmem:[%s250 + $0x28] sm:$0xff]
        %v289 = vld [vmem:[%s250 + $0x30] sm:$0xff]
        %v290 = vld [vmem:[%s250 + $0x38] sm:$0xff]
        %v291 = vld [vmem:[%s241] sm:$0xff]
        %v292 = vld [vmem:[%s241 + $0x8] sm:$0xff]
        %v293 = vld [vmem:[%s241 + $0x10] sm:$0xff]
        %v294 = vld [vmem:[%s241 + $0x18] sm:$0xff]
        %v295 = vld [vmem:[%s241 + $0x20] sm:$0xff]
        %v296 = vld [vmem:[%s241 + $0x28] sm:$0xff]
        %v297 = vld [vmem:[%s241 + $0x30] sm:$0xff]
        %v298 = vld [vmem:[%s241 + $0x38] sm:$0xff]
        %v299 = vld [vmem:[%s241 + $0x40] sm:$0xff]
        %v300 = vld [vmem:[%s241 + $0x48] sm:$0xff]
        %v301 = vld [vmem:[%s241 + $0x50] sm:$0xff]
        %v302 = vld [vmem:[%s241 + $0x58] sm:$0xff]
        %v303 = vld [vmem:[%s241 + $0x60] sm:$0xff]
        %v304 = vld [vmem:[%s241 + $0x68] sm:$0xff]
        %v305 = vld [vmem:[%s241 + $0x70] sm:$0xff]
        %v306 = vld [vmem:[%s241 + $0x78] sm:$0xff]
        %307 = vmatprep.subr.mxu0 0.0
        %308 = vmatpush1.msra.mxu0 %v306
        %309 = vmatprep.subr.mxu0 0.0
        %310 = vmatpush1.msra.mxu0 %v305
        %311 = vmatprep.subr.mxu0 0.0
        %312 = vmatpush1.msra.mxu0 %v304
        %313 = vmatprep.subr.mxu0 0.0
        %314 = vmatpush1.msra.mxu0 %v303
        %315 = vmatprep.subr.mxu0 0.0
        %316 = vmatpush1.msra.mxu0 %v302
        %317 = vmatprep.subr.mxu0 0.0
        %318 = vmatpush1.msra.mxu0 %v301
        %319 = vmatprep.subr.mxu0 0.0
        %320 = vmatpush1.msra.mxu0 %v300
        %321 = vmatprep.subr.mxu0 0.0
        %322 = vmatpush1.msra.mxu0 %v299
        %323 = vmatprep.subr.mxu0 0.0
        %324 = vmatpush1.msra.mxu0 %v298
        %325 = vmatprep.subr.mxu0 0.0
        %326 = vmatpush1.msra.mxu0 %v297
        %327 = vmatprep.subr.mxu0 0.0
        %328 = vmatpush1.msra.mxu0 %v296
        %329 = vmatprep.subr.mxu0 0.0
        %330 = vmatpush1.msra.mxu0 %v295
        %331 = vmatprep.subr.mxu0 0.0
        %332 = vmatpush1.msra.mxu0 %v294
        %333 = vmatprep.subr.mxu0 0.0
        %334 = vmatpush1.msra.mxu0 %v293
        %335 = vmatprep.subr.mxu0 0.0
        %336 = vmatpush1.msra.mxu0 %v292
        %337 = vmatprep.subr.mxu0 0.0
        %338 = vmatpush1.msra.mxu0 %v291
        %339 = vmatprep.subr.mxu0 0.0
        %340 = vmatpush2.msra.mxu0 0.0
        %341 = vmatprep.subr.mxu0 0.0
        %342 = vmatpush2.msra.mxu0 0.0
        %343 = vmatprep.subr.mxu0 0.0
        %344 = vmatpush2.msra.mxu0 0.0
        %345 = vmatprep.subr.mxu0 0.0
        %346 = vmatpush2.msra.mxu0 0.0
        %347 = vmatprep.subr.mxu0 0.0
        %348 = vmatpush2.msra.mxu0 0.0
        %349 = vmatprep.subr.mxu0 0.0
        %350 = vmatpush2.msra.mxu0 0.0
        %351 = vmatprep.subr.mxu0 0.0
        %352 = vmatpush2.msra.mxu0 0.0
        %353 = vmatprep.subr.mxu0 0.0
        %354 = vmatpush2.msra.mxu0 0.0
        %355 = vmatprep.subr.mxu0 0.0
        %356 = vmatpush2.msra.mxu0 0.0
        %357 = vmatprep.subr.mxu0 0.0
        %358 = vmatpush2.msra.mxu0 0.0
        %359 = vmatprep.subr.mxu0 0.0
        %360 = vmatpush2.msra.mxu0 0.0
        %361 = vmatprep.subr.mxu0 0.0
        %362 = vmatpush2.msra.mxu0 0.0
        %363 = vmatprep.subr.mxu0 0.0
        %364 = vmatpush2.msra.mxu0 0.0
        %365 = vmatprep.subr.mxu0 0.0
        %366 = vmatpush2.msra.mxu0 0.0
        %367 = vmatprep.subr.mxu0 0.0
        %368 = vmatpush2.msra.mxu0 0.0
        %369 = vmatprep.subr.mxu0 0.0
        %370 = vmatpush2.msra.mxu0 0.0
        %371 = vmatprep.mubr.f32.mxu0 0.0
        %372 = vmatmul.mubr.f32.gmra.mxu0 %v283
        %v373 = vpop.f32.mrf.mxu0
        %v374 = vadd.f32 0.0, %v373
        %v375 = vpop.f32.mrf.mxu0
        %376 = vmatprep.mubr.f32.mxu0 0.0
        %377 = vmatmul.mubr.f32.gmra.mxu0 %v284
        %v378 = vpop.f32.mrf.mxu0
        %v379 = vadd.f32 0.0, %v378
        %v380 = vpop.f32.mrf.mxu0
        %381 = vmatprep.mubr.f32.mxu0 0.0
        %382 = vmatmul.mubr.f32.gmra.mxu0 %v285
        %v383 = vpop.f32.mrf.mxu0
        %v384 = vadd.f32 0.0, %v383
        %v385 = vpop.f32.mrf.mxu0
        %386 = vmatprep.mubr.f32.mxu0 0.0
        %387 = vmatmul.mubr.f32.gmra.mxu0 %v286
        %v388 = vpop.f32.mrf.mxu0
        %v389 = vadd.f32 0.0, %v388
        %v390 = vpop.f32.mrf.mxu0
        %391 = vmatprep.mubr.f32.mxu0 0.0
        %392 = vmatmul.mubr.f32.gmra.mxu0 %v287
        %v393 = vpop.f32.mrf.mxu0
        %v394 = vadd.f32 0.0, %v393
        %v395 = vpop.f32.mrf.mxu0
        %396 = vmatprep.mubr.f32.mxu0 0.0
        %397 = vmatmul.mubr.f32.gmra.mxu0 %v288
        %v398 = vpop.f32.mrf.mxu0
        %v399 = vadd.f32 0.0, %v398
        %v400 = vpop.f32.mrf.mxu0
        %401 = vmatprep.mubr.f32.mxu0 0.0
        %402 = vmatmul.mubr.f32.gmra.mxu0 %v289
        %v403 = vpop.f32.mrf.mxu0
        %v404 = vadd.f32 0.0, %v403
        %v405 = vpop.f32.mrf.mxu0
        %406 = vmatprep.mubr.f32.mxu0 0.0
        %407 = vmatmul.mubr.f32.gmra.mxu0 %v290
        %v408 = vpop.f32.mrf.mxu0
        %v409 = vadd.f32 0.0, %v408
        %v410 = vpop.f32.mrf.mxu0
        %411 = vdwg.mxu0
        %v412 = vld [vmem:[%s232] sm:$0xff]
        %v413 = vld [vmem:[%s232 + $0x8] sm:$0xff]
        %vm414 = vcmask 130048
        %v416 = vsel %vm414, %v412, 0
        %v419 = vsel %vm414, %v413, 0
        %421 = vmatprep.subr.mxu0 0.0
        %422 = vmatpush1.msra.mxu0 0.0
        %423 = vmatprep.subr.mxu0 0.0
        %424 = vmatpush1.msra.mxu0 0.0
        %425 = vmatprep.subr.mxu0 0.0
        %426 = vmatpush1.msra.mxu0 0.0
        %427 = vmatprep.subr.mxu0 0.0
        %428 = vmatpush1.msra.mxu0 0.0
        %429 = vmatprep.subr.mxu0 0.0
        %430 = vmatpush1.msra.mxu0 0.0
        %431 = vmatprep.subr.mxu0 0.0
        %432 = vmatpush1.msra.mxu0 0.0
        %433 = vmatprep.subr.mxu0 0.0
        %434 = vmatpush1.msra.mxu0 0.0
        %435 = vmatprep.subr.mxu0 0.0
        %436 = vmatpush1.msra.mxu0 0.0
        %437 = vmatprep.subr.mxu0 0.0
        %438 = vmatpush1.msra.mxu0 0.0
        %439 = vmatprep.subr.mxu0 0.0
        %440 = vmatpush1.msra.mxu0 0.0
        %441 = vmatprep.subr.mxu0 0.0
        %442 = vmatpush1.msra.mxu0 0.0
        %443 = vmatprep.subr.mxu0 0.0
        %444 = vmatpush1.msra.mxu0 0.0
        %445 = vmatprep.subr.mxu0 0.0
        %446 = vmatpush1.msra.mxu0 0.0
        %447 = vmatprep.subr.mxu0 0.0
        %448 = vmatpush1.msra.mxu0 0.0
        %449 = vmatprep.subr.mxu0 0.0
        %450 = vmatpush1.msra.mxu0 %v379
        %451 = vmatprep.subr.mxu0 0.0
        %452 = vmatpush1.msra.mxu0 %v374
        %453 = vmatprep.subr.mxu0 0.0
        %454 = vmatpush2.msra.mxu0 0.0
        %455 = vmatprep.subr.mxu0 0.0
        %456 = vmatpush2.msra.mxu0 0.0
        %457 = vmatprep.subr.mxu0 0.0
        %458 = vmatpush2.msra.mxu0 0.0
        %459 = vmatprep.subr.mxu0 0.0
        %460 = vmatpush2.msra.mxu0 0.0
        %461 = vmatprep.subr.mxu0 0.0
        %462 = vmatpush2.msra.mxu0 0.0
        %463 = vmatprep.subr.mxu0 0.0
        %464 = vmatpush2.msra.mxu0 0.0
        %465 = vmatprep.subr.mxu0 0.0
        %466 = vmatpush2.msra.mxu0 0.0
        %467 = vmatprep.subr.mxu0 0.0
        %468 = vmatpush2.msra.mxu0 0.0
        %469 = vmatprep.subr.mxu0 0.0
        %470 = vmatpush2.msra.mxu0 0.0
        %471 = vmatprep.subr.mxu0 0.0
        %472 = vmatpush2.msra.mxu0 0.0
        %473 = vmatprep.subr.mxu0 0.0
        %474 = vmatpush2.msra.mxu0 0.0
        %475 = vmatprep.subr.mxu0 0.0
        %476 = vmatpush2.msra.mxu0 0.0
        %477 = vmatprep.subr.mxu0 0.0
        %478 = vmatpush2.msra.mxu0 0.0
        %479 = vmatprep.subr.mxu0 0.0
        %480 = vmatpush2.msra.mxu0 0.0
        %481 = vmatprep.subr.mxu0 0.0
        %482 = vmatpush2.msra.mxu0 0.0
        %483 = vmatprep.subr.mxu0 0.0
        %484 = vmatpush2.msra.mxu0 0.0
        %485 = vmatprep.mubr.f32.mxu0 0.0
        %486 = vmatmul.mubr.f32.gmra.mxu0 %v416
        %v487 = vpop.f32.mrf.mxu0
        %v488 = vadd.f32 0.0, %v487
        %v489 = vpop.f32.mrf.mxu0
        %490 = vmatprep.mubr.f32.mxu0 0.0
        %491 = vmatmul.mubr.f32.gmra.mxu0 %v419
        %v492 = vpop.f32.mrf.mxu0
        %v493 = vadd.f32 0.0, %v492
        %v494 = vpop.f32.mrf.mxu0
        %495 = vdwg.mxu0
        %496 = vst [vmem:[%s282] sm:$0xff] %v488
        %497 = vst [vmem:[%s282 + $0x8] sm:$0xff] %v493
        %498 = vmatprep.subr.mxu0 0.0
        %499 = vmatpush1.msra.mxu0 0.0
        %500 = vmatprep.subr.mxu0 0.0
        %501 = vmatpush1.msra.mxu0 0.0
        %502 = vmatprep.subr.mxu0 0.0
        %503 = vmatpush1.msra.mxu0 0.0
        %504 = vmatprep.subr.mxu0 0.0
        %505 = vmatpush1.msra.mxu0 0.0
        %506 = vmatprep.subr.mxu0 0.0
        %507 = vmatpush1.msra.mxu0 0.0
        %508 = vmatprep.subr.mxu0 0.0
        %509 = vmatpush1.msra.mxu0 0.0
        %510 = vmatprep.subr.mxu0 0.0
        %511 = vmatpush1.msra.mxu0 0.0
        %512 = vmatprep.subr.mxu0 0.0
        %513 = vmatpush1.msra.mxu0 0.0
        %514 = vmatprep.subr.mxu0 0.0
        %515 = vmatpush1.msra.mxu0 0.0
        %516 = vmatprep.subr.mxu0 0.0
        %517 = vmatpush1.msra.mxu0 0.0
        %518 = vmatprep.subr.mxu0 0.0
        %519 = vmatpush1.msra.mxu0 0.0
        %520 = vmatprep.subr.mxu0 0.0
        %521 = vmatpush1.msra.mxu0 0.0
        %522 = vmatprep.subr.mxu0 0.0
        %523 = vmatpush1.msra.mxu0 0.0
        %524 = vmatprep.subr.mxu0 0.0
        %525 = vmatpush1.msra.mxu0 0.0
        %526 = vmatprep.subr.mxu0 0.0
        %527 = vmatpush1.msra.mxu0 %v389
        %528 = vmatprep.subr.mxu0 0.0
        %529 = vmatpush1.msra.mxu0 %v384
        %530 = vmatprep.subr.mxu0 0.0
        %531 = vmatpush2.msra.mxu0 0.0
        %532 = vmatprep.subr.mxu0 0.0
        %533 = vmatpush2.msra.mxu0 0.0
        %534 = vmatprep.subr.mxu0 0.0
        %535 = vmatpush2.msra.mxu0 0.0
        %536 = vmatprep.subr.mxu0 0.0
        %537 = vmatpush2.msra.mxu0 0.0
        %538 = vmatprep.subr.mxu0 0.0
        %539 = vmatpush2.msra.mxu0 0.0
        %540 = vmatprep.subr.mxu0 0.0
        %541 = vmatpush2.msra.mxu0 0.0
        %542 = vmatprep.subr.mxu0 0.0
        %543 = vmatpush2.msra.mxu0 0.0
        %544 = vmatprep.subr.mxu0 0.0
        %545 = vmatpush2.msra.mxu0 0.0
        %546 = vmatprep.subr.mxu0 0.0
        %547 = vmatpush2.msra.mxu0 0.0
        %548 = vmatprep.subr.mxu0 0.0
        %549 = vmatpush2.msra.mxu0 0.0
        %550 = vmatprep.subr.mxu0 0.0
        %551 = vmatpush2.msra.mxu0 0.0
        %552 = vmatprep.subr.mxu0 0.0
        %553 = vmatpush2.msra.mxu0 0.0
        %554 = vmatprep.subr.mxu0 0.0
        %555 = vmatpush2.msra.mxu0 0.0
        %556 = vmatprep.subr.mxu0 0.0
        %557 = vmatpush2.msra.mxu0 0.0
        %558 = vmatprep.subr.mxu0 0.0
        %559 = vmatpush2.msra.mxu0 0.0
        %560 = vmatprep.subr.mxu0 0.0
        %561 = vmatpush2.msra.mxu0 0.0
        %562 = vmatprep.mubr.f32.mxu0 0.0
        %563 = vmatmul.mubr.f32.gmra.mxu0 %v416
        %v564 = vpop.f32.mrf.mxu0
        %v565 = vadd.f32 0.0, %v564
        %v566 = vpop.f32.mrf.mxu0
        %567 = vmatprep.mubr.f32.mxu0 0.0
        %568 = vmatmul.mubr.f32.gmra.mxu0 %v419
        %v569 = vpop.f32.mrf.mxu0
        %v570 = vadd.f32 0.0, %v569
        %v571 = vpop.f32.mrf.mxu0
        %572 = vdwg.mxu0
        %s573 = scalar_lea.vmem %s282, 16 [#allocation8]
        %574 = vst [vmem:[%s573] sm:$0xff] %v565
        %575 = vst [vmem:[%s573 + $0x8] sm:$0xff] %v570
        %576 = vmatprep.subr.mxu0 0.0
        %577 = vmatpush1.msra.mxu0 0.0
        %578 = vmatprep.subr.mxu0 0.0
        %579 = vmatpush1.msra.mxu0 0.0
        %580 = vmatprep.subr.mxu0 0.0
        %581 = vmatpush1.msra.mxu0 0.0
        %582 = vmatprep.subr.mxu0 0.0
        %583 = vmatpush1.msra.mxu0 0.0
        %584 = vmatprep.subr.mxu0 0.0
        %585 = vmatpush1.msra.mxu0 0.0
        %586 = vmatprep.subr.mxu0 0.0
        %587 = vmatpush1.msra.mxu0 0.0
        %588 = vmatprep.subr.mxu0 0.0
        %589 = vmatpush1.msra.mxu0 0.0
        %590 = vmatprep.subr.mxu0 0.0
        %591 = vmatpush1.msra.mxu0 0.0
        %592 = vmatprep.subr.mxu0 0.0
        %593 = vmatpush1.msra.mxu0 0.0
        %594 = vmatprep.subr.mxu0 0.0
        %595 = vmatpush1.msra.mxu0 0.0
        %596 = vmatprep.subr.mxu0 0.0
        %597 = vmatpush1.msra.mxu0 0.0
        %598 = vmatprep.subr.mxu0 0.0
        %599 = vmatpush1.msra.mxu0 0.0
        %600 = vmatprep.subr.mxu0 0.0
        %601 = vmatpush1.msra.mxu0 0.0
        %602 = vmatprep.subr.mxu0 0.0
        %603 = vmatpush1.msra.mxu0 0.0
        %604 = vmatprep.subr.mxu0 0.0
        %605 = vmatpush1.msra.mxu0 %v399
        %606 = vmatprep.subr.mxu0 0.0
        %607 = vmatpush1.msra.mxu0 %v394
        %608 = vmatprep.subr.mxu0 0.0
        %609 = vmatpush2.msra.mxu0 0.0
        %610 = vmatprep.subr.mxu0 0.0
        %611 = vmatpush2.msra.mxu0 0.0
        %612 = vmatprep.subr.mxu0 0.0
        %613 = vmatpush2.msra.mxu0 0.0
        %614 = vmatprep.subr.mxu0 0.0
        %615 = vmatpush2.msra.mxu0 0.0
        %616 = vmatprep.subr.mxu0 0.0
        %617 = vmatpush2.msra.mxu0 0.0
        %618 = vmatprep.subr.mxu0 0.0
        %619 = vmatpush2.msra.mxu0 0.0
        %620 = vmatprep.subr.mxu0 0.0
        %621 = vmatpush2.msra.mxu0 0.0
        %622 = vmatprep.subr.mxu0 0.0
        %623 = vmatpush2.msra.mxu0 0.0
        %624 = vmatprep.subr.mxu0 0.0
        %625 = vmatpush2.msra.mxu0 0.0
        %626 = vmatprep.subr.mxu0 0.0
        %627 = vmatpush2.msra.mxu0 0.0
        %628 = vmatprep.subr.mxu0 0.0
        %629 = vmatpush2.msra.mxu0 0.0
        %630 = vmatprep.subr.mxu0 0.0
        %631 = vmatpush2.msra.mxu0 0.0
        %632 = vmatprep.subr.mxu0 0.0
        %633 = vmatpush2.msra.mxu0 0.0
        %634 = vmatprep.subr.mxu0 0.0
        %635 = vmatpush2.msra.mxu0 0.0
        %636 = vmatprep.subr.mxu0 0.0
        %637 = vmatpush2.msra.mxu0 0.0
        %638 = vmatprep.subr.mxu0 0.0
        %639 = vmatpush2.msra.mxu0 0.0
        %640 = vmatprep.mubr.f32.mxu0 0.0
        %641 = vmatmul.mubr.f32.gmra.mxu0 %v416
        %v642 = vpop.f32.mrf.mxu0
        %v643 = vadd.f32 0.0, %v642
        %v644 = vpop.f32.mrf.mxu0
        %645 = vmatprep.mubr.f32.mxu0 0.0
        %646 = vmatmul.mubr.f32.gmra.mxu0 %v419
        %v647 = vpop.f32.mrf.mxu0
        %v648 = vadd.f32 0.0, %v647
        %v649 = vpop.f32.mrf.mxu0
        %650 = vdwg.mxu0
        %s651 = scalar_lea.vmem %s282, 32 [#allocation8]
        %652 = vst [vmem:[%s651] sm:$0xff] %v643
        %653 = vst [vmem:[%s651 + $0x8] sm:$0xff] %v648
        %654 = vmatprep.subr.mxu0 0.0
        %655 = vmatpush1.msra.mxu0 0.0
        %656 = vmatprep.subr.mxu0 0.0
        %657 = vmatpush1.msra.mxu0 0.0
        %658 = vmatprep.subr.mxu0 0.0
        %659 = vmatpush1.msra.mxu0 0.0
        %660 = vmatprep.subr.mxu0 0.0
        %661 = vmatpush1.msra.mxu0 0.0
        %662 = vmatprep.subr.mxu0 0.0
        %663 = vmatpush1.msra.mxu0 0.0
        %664 = vmatprep.subr.mxu0 0.0
        %665 = vmatpush1.msra.mxu0 0.0
        %666 = vmatprep.subr.mxu0 0.0
        %667 = vmatpush1.msra.mxu0 0.0
        %668 = vmatprep.subr.mxu0 0.0
        %669 = vmatpush1.msra.mxu0 0.0
        %670 = vmatprep.subr.mxu0 0.0
        %671 = vmatpush1.msra.mxu0 0.0
        %672 = vmatprep.subr.mxu0 0.0
        %673 = vmatpush1.msra.mxu0 0.0
        %674 = vmatprep.subr.mxu0 0.0
        %675 = vmatpush1.msra.mxu0 0.0
        %676 = vmatprep.subr.mxu0 0.0
        %677 = vmatpush1.msra.mxu0 0.0
        %678 = vmatprep.subr.mxu0 0.0
        %679 = vmatpush1.msra.mxu0 0.0
        %680 = vmatprep.subr.mxu0 0.0
        %681 = vmatpush1.msra.mxu0 0.0
        %682 = vmatprep.subr.mxu0 0.0
        %683 = vmatpush1.msra.mxu0 %v409
        %684 = vmatprep.subr.mxu0 0.0
        %685 = vmatpush1.msra.mxu0 %v404
        %686 = vmatprep.subr.mxu0 0.0
        %687 = vmatpush2.msra.mxu0 0.0
        %688 = vmatprep.subr.mxu0 0.0
        %689 = vmatpush2.msra.mxu0 0.0
        %690 = vmatprep.subr.mxu0 0.0
        %691 = vmatpush2.msra.mxu0 0.0
        %692 = vmatprep.subr.mxu0 0.0
        %693 = vmatpush2.msra.mxu0 0.0
        %694 = vmatprep.subr.mxu0 0.0
        %695 = vmatpush2.msra.mxu0 0.0
        %696 = vmatprep.subr.mxu0 0.0
        %697 = vmatpush2.msra.mxu0 0.0
        %698 = vmatprep.subr.mxu0 0.0
        %699 = vmatpush2.msra.mxu0 0.0
        %700 = vmatprep.subr.mxu0 0.0
        %701 = vmatpush2.msra.mxu0 0.0
        %702 = vmatprep.subr.mxu0 0.0
        %703 = vmatpush2.msra.mxu0 0.0
        %704 = vmatprep.subr.mxu0 0.0
        %705 = vmatpush2.msra.mxu0 0.0
        %706 = vmatprep.subr.mxu0 0.0
        %707 = vmatpush2.msra.mxu0 0.0
        %708 = vmatprep.subr.mxu0 0.0
        %709 = vmatpush2.msra.mxu0 0.0
        %710 = vmatprep.subr.mxu0 0.0
        %711 = vmatpush2.msra.mxu0 0.0
        %712 = vmatprep.subr.mxu0 0.0
        %713 = vmatpush2.msra.mxu0 0.0
        %714 = vmatprep.subr.mxu0 0.0
        %715 = vmatpush2.msra.mxu0 0.0
        %716 = vmatprep.subr.mxu0 0.0
        %717 = vmatpush2.msra.mxu0 0.0
        %718 = vmatprep.mubr.f32.mxu0 0.0
        %719 = vmatmul.mubr.f32.gmra.mxu0 %v416
        %v720 = vpop.f32.mrf.mxu0
        %v721 = vadd.f32 0.0, %v720
        %v722 = vpop.f32.mrf.mxu0
        %723 = vmatprep.mubr.f32.mxu0 0.0
        %724 = vmatmul.mubr.f32.gmra.mxu0 %v419
        %v725 = vpop.f32.mrf.mxu0
        %v726 = vadd.f32 0.0, %v725
        %v727 = vpop.f32.mrf.mxu0
        %728 = vdwg.mxu0
        %s729 = scalar_lea.vmem %s282, 48 [#allocation8]
        %730 = vst [vmem:[%s729] sm:$0xff] %v721
        %731 = vst [vmem:[%s729 + $0x8] sm:$0xff] %v726
        %s732 = sand.u32 %s125, 1
        %s733 = scalar_lea.sflag [#allocation4], %s732
        %s734 = sand.u32 %s125, 1
        %s735 = smul.addr %s734, 64
        %s736 = scalar_lea.vmem [#allocation8], %s735
        // Predicated region
        $region45: #{tpu_custom_call.1} parent=31 // pred_check
          %p737 = pneg %p135
        $region46: #{tpu_custom_call.1} parent=31 // pred_check_branch
          %739 = sbr.rel (%p737) target = $region48
        $region47: #{tpu_custom_call.1} parent=31 // pred_region
          %s741 = ssub.s32 1024, 1024
          %742 = vsyncadd %s733, %s741
          %s743 = smul.addr %s27, 8
          %s744 = sadd.s32 %s28, %s743
          %s745 = smul.addr %s744, 128
          %s746 = scalar_lea.hbm %s3, %s745
          %s747 = sshll.u32 %s736, 4
          %s748 = int_to_ptr.vmem [resolvable:$true] %s747
          %753 = dma.vmem_to_hbm [thread:$0]  %s748, 1024, %s746, %s733, 128, 128, 8
        $region48: #{tpu_custom_call.1} parent=31 // pred_fallthru
          _
      $region32: #{tpu_custom_call.1} parent=5 // pred_fallthru
        _
      %p754 = scmp.le.s32.totalorder 2, %s18
      // Predicated region
      $region49: #{tpu_custom_call.1} parent=5 // pred_check
        %p755 = pneg %p754
      $region50: #{tpu_custom_call.1} parent=5 // pred_check_branch
        %757 = sbr.rel (%p755) target = $region52
      $region51: #{tpu_custom_call.1} parent=5 // pred_region
        %s758 = ssub.s32 %s18, 2
        // Predicated region
        $region53: #{tpu_custom_call.1} parent=51 // pred_check
          %p759 = pneg %p141
        $region54: #{tpu_custom_call.1} parent=51 // pred_check_branch
          %761 = sbr.rel (%p759) target = $region56
        $region55: #{tpu_custom_call.1} parent=51 // pred_region
          %s762 = sand.u32 %s126, 1
          %s763 = scalar_lea.sflag [#allocation4], %s762
          %s764 = sand.u32 %s126, 1
          %s765 = smul.addr %s764, 64
          %s766 = scalar_lea.vmem [#allocation8], %s765
          %767 = dma.done %s763, 1024
        $region56: #{tpu_custom_call.1} parent=51 // pred_fallthru
          _
      $region52: #{tpu_custom_call.1} parent=5 // pred_fallthru
        _
    $region6: #{tpu_custom_call.1} parent=1 // loop_footer
      %s22 = sadd.s32 1, %s18
    $region7: #{tpu_custom_call.1} parent=1 // loop_footer_branch
      %17 = sbr.rel target = $region3
    $region8: #{tpu_custom_call.1} parent=1 // loop_exit
      _
    %768 = vsyncpa [#allocation3], 1
    %s769 = scalar_lea.sflag [#allocation3], 1
    %770 = vsyncpa %s769, 1
    %771 = vsyncpa [#allocation6], 1
    %s772 = scalar_lea.sflag [#allocation6], 1
    %773 = vsyncpa %s772, 1
    %774 = vsyncpa [#allocation4], 1
    %s775 = scalar_lea.sflag [#allocation4], 1
    %776 = vsyncpa %s775, 1

</llo_original>
